<compile_context>
chip_gen: v7x
topology: tpu7x:2x2x1
jax: 0.10.0
libtpu: 0.0.40
codegen_flags: <defaults>
</compile_context>

<pallas_src>
import functools

import jax
import jax.numpy as jnp
from jax.experimental import pallas as pl
from jax.experimental.pallas import tpu as pltpu


# ----------------------------------------------------------------------------
# Glue: sampling / grouping (data-dependent gathers & sorts -> plain JAX)
# ----------------------------------------------------------------------------

def square_distance(src, dst):
    # src [B,N,C], dst [B,M,C] -> [B,N,M]
    dist = -2.0 * jnp.einsum("bnc,bmc->bnm", src, dst)
    dist += jnp.sum(src ** 2, -1)[:, :, None]
    dist += jnp.sum(dst ** 2, -1)[:, None, :]
    return dist


def farthest_point_sample(xyz, npoint):
    # xyz [B,N,3] -> [B,npoint] int32
    B, N, _ = xyz.shape

    def body(i, state):
        centroids, distance, farthest = state
        centroids = centroids.at[:, i].set(farthest)
        centroid = jnp.take_along_axis(xyz, farthest[:, None, None], axis=1)  # [B,1,3]
        dist = jnp.sum((xyz - centroid) ** 2, -1)
        distance = jnp.minimum(distance, dist)
        farthest = jnp.argmax(distance, -1).astype(jnp.int32)
        return centroids, distance, farthest

    centroids = jnp.zeros((B, npoint), jnp.int32)
    distance = jnp.full((B, N), 1e10, xyz.dtype)
    # TODO(synk): torch uses torch.randint for the initial farthest index; fixed to 0 for determinism.
    farthest = jnp.zeros((B,), jnp.int32)
    centroids, _, _ = jax.lax.fori_loop(0, npoint, body, (centroids, distance, farthest))
    return centroids


def index_points(points, idx):
    # points [B,N,C], idx [B,...] -> [B,...,C]
    return jax.vmap(lambda p, i: p[i])(points, idx)


def query_ball_point(radius, nsample, xyz, new_xyz):
    B, N, _ = xyz.shape
    S = new_xyz.shape[1]
    sqrdists = square_distance(new_xyz, xyz)  # [B,S,N]
    group_idx = jnp.broadcast_to(jnp.arange(N, dtype=jnp.int32)[None, None, :], (B, S, N))
    group_idx = jnp.where(sqrdists > radius ** 2, N, group_idx)
    group_idx = jnp.sort(group_idx, axis=-1)[:, :, :nsample]
    group_first = jnp.broadcast_to(group_idx[:, :, :1], group_idx.shape)
    group_idx = jnp.where(group_idx == N, group_first, group_idx)
    return group_idx


def sample_and_group(npoint, radius, nsample, xyz, points, feat_dtype=jnp.bfloat16):
    # Sampling / radius query in f32 for selection accuracy; grouped FEATURES are
    # produced in bf16 (cast BEFORE the gather: halves gather + HBM traffic on the
    # largest tensor and removes the wrapper-side recast pass).
    B, N, C = xyz.shape
    fps_idx = farthest_point_sample(xyz, npoint)                 # [B,S]
    new_xyz = index_points(xyz, fps_idx)                         # [B,S,3] f32
    idx = query_ball_point(radius, nsample, xyz, new_xyz)        # [B,S,K]
    grouped_xyz = index_points(xyz.astype(feat_dtype), idx)      # [B,S,K,3] bf16
    grouped_xyz_norm = grouped_xyz - new_xyz.astype(feat_dtype)[:, :, None, :]
    if points is not None:
        grouped_points = index_points(points.astype(feat_dtype), idx)   # [B,S,K,D] bf16
        new_points = jnp.concatenate([grouped_xyz_norm, grouped_points], axis=-1)
    else:
        new_points = grouped_xyz_norm
    return new_xyz, new_points                                   # [B,S,3] f32, [B,S,K,3+D] bf16


def sample_and_group_all(xyz, points, feat_dtype=jnp.bfloat16):
    B, N, C = xyz.shape
    new_xyz = jnp.zeros((B, 1, C), xyz.dtype)
    grouped_xyz = xyz.astype(feat_dtype)[:, None, :, :]
    if points is not None:
        new_points = jnp.concatenate(
            [grouped_xyz, points.astype(feat_dtype)[:, None, :, :]], axis=-1)
    else:
        new_points = grouped_xyz
    return new_xyz, new_points


# ----------------------------------------------------------------------------
# Parameters: Conv2d(1x1)+BN2d folded into (W [Cin,Cout], b [1,Cout]); same for
# the residual Conv1d(1)+BN1d branch. Eval-mode BN statistics, deterministic.
# ----------------------------------------------------------------------------

def _folded_conv_bn(key, c_in, c_out, eps=1e-5):
    k = jax.random.split(key, 4)
    W = 0.2 * jax.random.normal(k[0], (c_out, c_in), jnp.float32)
    b = 0.1 * jax.random.normal(k[1], (c_out,), jnp.float32)
    gamma = 1.0 + 0.1 * jax.random.normal(k[2], (c_out,), jnp.float32)
    beta = 0.1 * jax.random.normal(k[3], (c_out,), jnp.float32)
    mean = jnp.zeros((c_out,), jnp.float32)
    var = jnp.ones((c_out,), jnp.float32)
    scale = gamma / jnp.sqrt(var + eps)
    w_f = (W * scale[:, None]).T                   # [Cin, Cout]
    b_f = (scale * (b - mean) + beta)[None, :]     # [1, Cout]
    return w_f, b_f


def init_params(key, in_channel, mlp, res_type):
    keys = jax.random.split(key, len(mlp) + 1)
    layers = []
    last = in_channel
    for i, out in enumerate(mlp):
        layers.append(_folded_conv_bn(keys[i], last, out))
        last = out
    res = None
    if res_type == "plus":
        res = _folded_conv_bn(keys[-1], in_channel, mlp[-1])
    elif res_type == "cat":
        res = _folded_conv_bn(keys[-1], in_channel + mlp[-1], mlp[-1])
    return {"layers": layers, "res": res}


# ----------------------------------------------------------------------------
# Pallas kernel: grid (B, S/tS, K/kc)
#   per step: [tS, kc, Cin] -> MLP chain -> per-chunk max -> running max in VMEM scratch
#   last K step: residual -> (lane-dense transposed) store
# ----------------------------------------------------------------------------

def _sa_mlp_kernel(num_layers, tS, kc, c_in, c_out, res_type, transpose_out, *refs):
    x_ref, x0_ref = refs[0], refs[1]
    out_ref, acc_ref = refs[-2], refs[-1]
    prefs = refs[2:-2]

    k = pl.program_id(2)
    nk = pl.num_programs(2)

    x = x_ref[0]                                    # [tS, kc, Cin] bf16
    h = x.reshape(tS * kc, c_in)                    # fold (tS,kc) into matmul M

    # MLP chain: each weight/bias read exactly once per body (the chunk loop is the grid).
    for li in range(num_layers):
        w = prefs[2 * li][...]                      # [Cin_i, Cout_i] bf16
        b = prefs[2 * li + 1][...]                  # [1, Cout_i] f32
        z = jnp.dot(h, w, preferred_element_type=jnp.float32) + b
        hf = jnp.maximum(z, 0.0)
        h = hf.astype(jnp.bfloat16) if li + 1 < num_layers else hf

    if kc > 1:
        chunk_max = jnp.max(h.reshape(tS, kc, c_out), axis=1)    # [tS, Cout] f32
    else:
        chunk_max = h.reshape(tS, c_out)

    @pl.when(k == 0)
    def _():
        acc_ref[...] = jnp.full_like(acc_ref, -jnp.inf)

    acc_ref[...] = jnp.maximum(acc_ref[...], chunk_max)          # running max over K chunks

    @pl.when(k == nk - 1)
    def _():
        pooled = acc_ref[...]                       # [tS, Cout] f32
        x0 = x0_ref[0]                              # [tS, Cin] bf16 (k=0 group member, pre-sliced)
        if res_type == "plus":
            wr = prefs[2 * num_layers][...]
            br = prefs[2 * num_layers + 1][...]
            tmp = jnp.maximum(
                jnp.dot(x0, wr, preferred_element_type=jnp.float32) + br, 0.0)
            pooled = pooled + tmp
        elif res_type == "cat":
            wr = prefs[2 * num_layers][...]         # [(Cout + Cin), Cout] bf16
            br = prefs[2 * num_layers + 1][...]
            # torch does cat([pooled, x0], channel) @ wr; split wr rows instead of
            # concatenating on the lane axis (same FLOPs, no relayout).
            wr_top = wr[:c_out, :]
            wr_bot = wr[c_out:, :]
            z = (jnp.dot(pooled.astype(jnp.bfloat16), wr_top,
                         preferred_element_type=jnp.float32)
                 + jnp.dot(x0, wr_bot, preferred_element_type=jnp.float32)
                 + br)
            pooled = jnp.maximum(z, 0.0)

        # TODO(synk): if downstream accepts bf16, store bf16 here to halve writeback bytes.
        if transpose_out:
            # Lane axis carries tS (lane-dense, unmasked vst) — only used when tS % 128 == 0.
            out_ref[...] = jnp.transpose(pooled).reshape(1, c_out, tS)
        else:
            out_ref[...] = pooled.reshape(1, tS, c_out)


# ----------------------------------------------------------------------------
# Generation-aware tile / VMEM-budget selection
# ----------------------------------------------------------------------------

def _physical_vmem_bytes():
    try:
        info = pltpu.get_tpu_info()
        for name in ("vmem_capacity_bytes", "vmem_size_bytes", "vmem_bytes"):
            v = getattr(info, name, None)
            if v:
                return int(v)
    except Exception:
        pass
    return 64 << 20   # conservative fallback = v7x per-TensorCore VMEM


def _estimate_vmem(tS, kc, c_in, c_out, layer_shapes):
    bf16, f32 = 2, 4
    widest = max(co for _, co in layer_shapes)
    x_blk = 2 * tS * kc * c_in * bf16              # grouped features, double-buffered
    x0_blk = 2 * tS * c_in * bf16
    out_blk = 2 * tS * c_out * f32
    # TODO(synk): weight blocks are double-buffered by default despite constant index maps;
    # pipeline_mode=pl.Buffered(1) would reclaim half of w_bytes on wide last layers.
    w_bytes = 2 * sum(ci * co * bf16 + co * f32 for ci, co in layer_shapes)
    act = 3 * tS * kc * widest * f32               # live per-layer intermediates
    acc = tS * c_out * f32                         # running-max scratch
    return int((x_blk + x0_blk + out_blk + w_bytes + act + acc) * 1.3)


def _choose_tiling(B, S, K, c_in, c_out, layer_shapes):
    phys = _physical_vmem_bytes()
    # ~50 MiB on 64 MiB parts (v7x: leave headroom for Mosaic scratch/semaphores),
    # ~100 MiB on 128 MiB parts (v5e/v6e: use the larger VMEM for bigger tiles).
    budget = min(int(phys * 0.78), 100 << 20)

    def divisors(n):
        return [d for d in range(n, 0, -1) if n % d == 0]

    sdiv = divisors(S)
    # Prefer the largest multiple-of-128 divisor of S (lane-dense transposed output,
    # fewer grid steps), then S itself, then mult-of-8 divisors (sublane-aligned blocks).
    ts_cands = ([d for d in sdiv if d % 128 == 0]
                + ([S] if S % 128 != 0 else [])
                + [d for d in sdiv if d % 8 == 0 and d % 128 != 0 and d != S])

    kdiv = divisors(K)
    # Prefer kc = K (one matmul per layer, single reduce); otherwise chunks aligned to the
    # bf16 (16,128) sublane tiling so slices don't force repacks.
    kc_cands = ([K]
                + [d for d in kdiv if d % 16 == 0 and d != K]
                + [d for d in kdiv if d % 8 == 0 and d % 16 != 0 and d != K])

    chosen = None
    for ts in ts_cands:
        for kc in kc_cands:
            if _estimate_vmem(ts, kc, c_in, c_out, layer_shapes) <= budget:
                chosen = (ts, kc)
                break
        if chosen is not None:
            break
    if chosen is None:
        chosen = (ts_cands[-1], kc_cands[-1])      # best effort for extreme configs
    ts, kc = chosen

    # v7x has 2 TensorCores sharing the parallel grid axes: ensure >= 2 parallel steps
    # when a smaller aligned tile that still fits exists.
    if B * (S // ts) < 2:
        for t2 in ts_cands:
            if t2 < ts and B * (S // t2) >= 2 and \
                    _estimate_vmem(t2, kc, c_in, c_out, layer_shapes) <= budget:
                ts = t2
                break

    est = _estimate_vmem(ts, kc, c_in, c_out, layer_shapes)
    vmem_limit = int(min(budget, max(32 << 20, est * 1.5)))
    vmem_limit = int(min(max(vmem_limit, est), phys * 0.95))   # never request less than needed
    return ts, kc, vmem_limit


# ----------------------------------------------------------------------------
# pallas_call wrapper
# ----------------------------------------------------------------------------

def _run_mlp_kernel(new_points_cl, x0, params, res_type):
    B, S, K, Cin = new_points_cl.shape
    num_layers = len(params["layers"])
    C_out = params["layers"][-1][0].shape[1]

    layer_shapes = [w.shape for (w, _) in params["layers"]]
    if res_type in ("plus", "cat"):
        layer_shapes = layer_shapes + [params["res"][0].shape]

    tS, kc, vmem_limit = _choose_tiling(B, S, K, Cin, C_out, layer_shapes)
    # Transposed (lane = tS) emission only when lane-dense; otherwise channels-last store
    # (avoids masked vst.msk on narrow lanes) + wrapper transpose.
    transpose_out = (tS % 128 == 0)

    # Inputs already bf16 from sample_and_group; guard cast is a no-op in that case.
    x_bf16 = new_points_cl if new_points_cl.dtype == jnp.bfloat16 \
        else new_points_cl.astype(jnp.bfloat16)
    x0_bf16 = x0 if x0.dtype == jnp.bfloat16 else x0.astype(jnp.bfloat16)

    weight_args = []
    in_specs = [
        pl.BlockSpec((1, tS, kc, Cin), lambda b, s, k: (b, s, k, 0)),   # grouped features chunk
        pl.BlockSpec((1, tS, Cin), lambda b, s, k: (b, s, 0)),          # residual features tile
    ]
    for (w, bia) in params["layers"]:
        wb = w.astype(jnp.bfloat16)
        weight_args += [wb, bia]
        in_specs += [pl.BlockSpec(wb.shape, lambda b, s, k: (0, 0)),
                     pl.BlockSpec(bia.shape, lambda b, s, k: (0, 0))]
    if res_type in ("plus", "cat"):
        wr, br = params["res"]
        wrb = wr.astype(jnp.bfloat16)
        weight_args += [wrb, br]
        in_specs += [pl.BlockSpec(wrb.shape, lambda b, s, k: (0, 0)),
                     pl.BlockSpec(br.shape, lambda b, s, k: (0, 0))]

    kernel = functools.partial(_sa_mlp_kernel, num_layers, tS, kc, Cin, C_out,
                               res_type, transpose_out)

    if transpose_out:
        out_shape = jax.ShapeDtypeStruct((B, C_out, S), jnp.float32)
        out_spec = pl.BlockSpec((1, C_out, tS), lambda b, s, k: (b, 0, s))
    else:
        out_shape = jax.ShapeDtypeStruct((B, S, C_out), jnp.float32)
        out_spec = pl.BlockSpec((1, tS, C_out), lambda b, s, k: (b, s, 0))

    out = pl.pallas_call(
        kernel,
        out_shape=out_shape,
        grid_spec=pltpu.PrefetchScalarGridSpec(
            num_scalar_prefetch=0,
            grid=(B, S // tS, K // kc),
            in_specs=in_specs,
            out_specs=out_spec,
            scratch_shapes=[pltpu.VMEM((tS, C_out), jnp.float32)],   # running-max accumulator
        ),
        compiler_params=pltpu.CompilerParams(
            dimension_semantics=("parallel", "parallel", "arbitrary"),
            vmem_limit_bytes=vmem_limit,
        ),
    )(x_bf16, x0_bf16, *weight_args)

    if not transpose_out:
        out = jnp.transpose(out, (0, 2, 1))
    return out                                      # [B, C_out, S]


# ----------------------------------------------------------------------------
# Full SetAbstraction forward (matches torch I/O layout: xyz [B,3,N], pts [B,D,N])
# ----------------------------------------------------------------------------

def set_abstraction_forward(params, xyz, points, *, npoint, radius, nsample,
                            group_all, res_type):
    xyz_t = jnp.transpose(xyz, (0, 2, 1))                      # [B,N,3]
    points_t = jnp.transpose(points, (0, 2, 1)) if points is not None else None
    if group_all:
        new_xyz, new_points = sample_and_group_all(xyz_t, points_t)
    else:
        new_xyz, new_points = sample_and_group(npoint, radius, nsample, xyz_t, points_t)
    # new_points: [B, S, K, Cin] channels-last bf16 (torch permutes to [B,Cin,K,S]; we do not)
    x0 = new_points[:, :, 0, :]                                # residual branch input [B,S,Cin]
    feat = _run_mlp_kernel(new_points, x0, params, res_type)   # [B, Cout, S]
    new_xyz_out = jnp.transpose(new_xyz, (0, 2, 1))            # [B,3,S]
    return new_xyz_out, feat, new_points


# Pure-JAX reference of the kernel portion (consumes the same bf16 grouped features so the
# check stays tight; vs. the pure-f32 torch math this only differs by bf16 quantization).
def _reference_mlp(new_points_cl, x0, params, res_type):
    h = new_points_cl.astype(jnp.bfloat16)                     # [B,S,K,Cin]
    num_layers = len(params["layers"])
    for li, (w, b) in enumerate(params["layers"]):
        z = jnp.einsum("bskc,cd->bskd", h, w.astype(jnp.bfloat16),
                       preferred_element_type=jnp.float32) + b.reshape(-1)
        hf = jnp.maximum(z, 0.0)
        h = hf.astype(jnp.bfloat16) if li + 1 < num_layers else hf
    pooled = jnp.max(h, axis=2)                                # [B,S,Cout] f32
    x0b = x0.astype(jnp.bfloat16)
    if res_type == "plus":
        wr, br = params["res"]
        tmp = jnp.maximum(
            jnp.einsum("bsc,cd->bsd", x0b, wr.astype(jnp.bfloat16),
                       preferred_element_type=jnp.float32) + br.reshape(-1), 0.0)
        pooled = pooled + tmp
    elif res_type == "cat":
        wr, br = params["res"]
        c_out = pooled.shape[-1]
        wrb = wr.astype(jnp.bfloat16)
        z = (jnp.einsum("bsc,cd->bsd", pooled.astype(jnp.bfloat16), wrb[:c_out],
                        preferred_element_type=jnp.float32)
             + jnp.einsum("bsc,cd->bsd", x0b, wrb[c_out:],
                          preferred_element_type=jnp.float32)
             + br.reshape(-1))
        pooled = jnp.maximum(z, 0.0)
    return jnp.transpose(pooled, (0, 2, 1))                    # [B, Cout, S]


if __name__ == "__main__":
    # Small, module-consistent shapes
    B, N, D = 2, 16, 4          # batch, points, extra feature channels
    npoint, radius, nsample = 8, 0.8, 8
    in_channel = 3 + D          # grouped_xyz_norm (3) concat grouped point features (D)
    mlp = [16, 32]
    group_all = False

    key = jax.random.PRNGKey(0)
    k_xyz, k_pts, k_par = jax.random.split(key, 3)
    xyz = jax.random.uniform(k_xyz, (B, 3, N), jnp.float32)     # [B, C=3, N]
    points = jax.random.normal(k_pts, (B, D, N), jnp.float32)   # [B, D, N]

    for res_type in ("plus", "cat", "None"):
        params = init_params(k_par, in_channel, mlp, res_type)
        new_xyz, new_feats, new_points_cl = set_abstraction_forward(
            params, xyz, points,
            npoint=npoint, radius=radius, nsample=nsample,
            group_all=group_all, res_type=res_type)
        jax.block_until_ready(new_feats)

        ref = _reference_mlp(new_points_cl, new_points_cl[:, :, 0, :], params, res_type)
        assert new_xyz.shape == (B, 3, npoint)
        assert new_feats.shape == (B, mlp[-1], npoint)
        assert jnp.allclose(new_feats, ref, atol=5e-3, rtol=5e-3), \
            f"Pallas kernel mismatch (res_type={res_type})"

    print("KERNEL_OK")
</pallas_src>

<mosaic_0001>
module attributes {stable_mosaic.version = 11 : i64} {
  func.func @_sa_mlp_kernel(%arg0: i32, %arg1: i32, %arg2: i32, %arg3: memref<1x8x8x7xbf16, #tpu.memory_space<vmem>>, %arg4: memref<1x8x7xbf16, #tpu.memory_space<vmem>>, %arg5: memref<7x16xbf16, #tpu.memory_space<vmem>>, %arg6: memref<1x16xf32, #tpu.memory_space<vmem>>, %arg7: memref<16x32xbf16, #tpu.memory_space<vmem>>, %arg8: memref<1x32xf32, #tpu.memory_space<vmem>>, %arg9: memref<7x32xbf16, #tpu.memory_space<vmem>>, %arg10: memref<1x32xf32, #tpu.memory_space<vmem>>, %arg11: memref<1x8x32xf32, #tpu.memory_space<vmem>>, %arg12: memref<8x32xf32, #tpu.memory_space<vmem>>) attributes {dimension_semantics = [#tpu.dimension_semantics<parallel>, #tpu.dimension_semantics<parallel>, #tpu.dimension_semantics<arbitrary>], iteration_bounds = array<i64: 2, 1, 1>, scalar_prefetch = 0 : i64, scratch_operands = 1 : i64, tpu.core_type = #tpu.core_type<tc>, window_params = [{transform_indices = @transform_0, window_bounds = array<i64: 1, 8, 8, 7>}, {transform_indices = @transform_1, window_bounds = array<i64: 1, 8, 7>}, {pipeline_mode = #tpu.pipeline_mode<synchronous>, transform_indices = @transform_2, window_bounds = array<i64: 7, 16>}, {pipeline_mode = #tpu.pipeline_mode<synchronous>, transform_indices = @transform_3, window_bounds = array<i64: 1, 16>}, {pipeline_mode = #tpu.pipeline_mode<synchronous>, transform_indices = @transform_4, window_bounds = array<i64: 16, 32>}, {pipeline_mode = #tpu.pipeline_mode<synchronous>, transform_indices = @transform_5, window_bounds = array<i64: 1, 32>}, {pipeline_mode = #tpu.pipeline_mode<synchronous>, transform_indices = @transform_6, window_bounds = array<i64: 7, 32>}, {pipeline_mode = #tpu.pipeline_mode<synchronous>, transform_indices = @transform_7, window_bounds = array<i64: 1, 32>}, {transform_indices = @transform_8, window_bounds = array<i64: 1, 8, 32>}]} {
    %c0 = arith.constant 0 : index
    %c0_0 = arith.constant 0 : index
    %c0_1 = arith.constant 0 : index
    %c0_2 = arith.constant 0 : index
    %0 = vector.load %arg3[%c0, %c0_0, %c0_1, %c0_2] : memref<1x8x8x7xbf16, #tpu.memory_space<vmem>>, vector<1x8x8x7xbf16>
    %1 = vector.shape_cast %0 : vector<1x8x8x7xbf16> to vector<8x8x7xbf16>
    %2 = vector.shape_cast %1 : vector<8x8x7xbf16> to vector<64x7xbf16>
    %c0_3 = arith.constant 0 : index
    %c0_4 = arith.constant 0 : index
    %3 = vector.load %arg5[%c0_3, %c0_4] : memref<7x16xbf16, #tpu.memory_space<vmem>>, vector<7x16xbf16>
    %c0_5 = arith.constant 0 : index
    %c0_6 = arith.constant 0 : index
    %4 = vector.load %arg6[%c0_5, %c0_6] : memref<1x16xf32, #tpu.memory_space<vmem>>, vector<1x16xf32>
    %cst = arith.constant dense<0.000000e+00> : vector<64x16xf32>
    %5 = tpu.matmul %2, %3, %cst {dimension_numbers = #tpu.dot_dimension_numbers<[1], [0], [0], [1], [0, 0, 1, 1], [], []>} : vector<64x7xbf16>, vector<7x16xbf16>, vector<64x16xf32> -> vector<64x16xf32>
    %6 = vector.broadcast %4 : vector<1x16xf32> to vector<64x16xf32>
    %7 = arith.addf %5, %6 : vector<64x16xf32>
    %cst_7 = arith.constant 0.000000e+00 : f32
    %8 = vector.broadcast %cst_7 : f32 to vector<64x16xf32>
    %9 = arith.maximumf %7, %8 : vector<64x16xf32>
    %10 = arith.truncf %9 : vector<64x16xf32> to vector<64x16xbf16>
    %c0_8 = arith.constant 0 : index
    %c0_9 = arith.constant 0 : index
    %11 = vector.load %arg7[%c0_8, %c0_9] : memref<16x32xbf16, #tpu.memory_space<vmem>>, vector<16x32xbf16>
    %c0_10 = arith.constant 0 : index
    %c0_11 = arith.constant 0 : index
    %12 = vector.load %arg8[%c0_10, %c0_11] : memref<1x32xf32, #tpu.memory_space<vmem>>, vector<1x32xf32>
    %cst_12 = arith.constant dense<0.000000e+00> : vector<64x32xf32>
    %13 = tpu.matmul %10, %11, %cst_12 {dimension_numbers = #tpu.dot_dimension_numbers<[1], [0], [0], [1], [0, 0, 1, 1], [], []>} : vector<64x16xbf16>, vector<16x32xbf16>, vector<64x32xf32> -> vector<64x32xf32>
    %14 = vector.broadcast %12 : vector<1x32xf32> to vector<64x32xf32>
    %15 = arith.addf %13, %14 : vector<64x32xf32>
    %cst_13 = arith.constant 0.000000e+00 : f32
    %16 = vector.broadcast %cst_13 : f32 to vector<64x32xf32>
    %17 = arith.maximumf %15, %16 : vector<64x32xf32>
    %18 = vector.shape_cast %17 : vector<64x32xf32> to vector<8x8x32xf32>
    %cst_14 = arith.constant dense<0xFF800000> : vector<8x32xf32>
    %19 = vector.multi_reduction <maximumf>, %18, %cst_14 [1] : vector<8x8x32xf32> to vector<8x32xf32>
    %c0_i32 = arith.constant 0 : i32
    %20 = arith.cmpi eq, %arg2, %c0_i32 : i32
    %21 = arith.extui %20 : i1 to i32
    %c0_i32_15 = arith.constant 0 : i32
    %22 = arith.cmpi ne, %21, %c0_i32_15 : i32
    scf.if %22 {
      %cst_22 = arith.constant 0xFF800000 : f32
      %29 = vector.broadcast %cst_22 : f32 to vector<8x32xf32>
      %c0_23 = arith.constant 0 : index
      %c0_24 = arith.constant 0 : index
      %30 = vector.load %arg12[%c0_23, %c0_24] : memref<8x32xf32, #tpu.memory_space<vmem>>, vector<8x32xf32>
      tpu.vector_store %arg12[%c0_23, %c0_24], %29 {strides = array<i32>} : memref<8x32xf32, #tpu.memory_space<vmem>>, vector<8x32xf32>,
    } else {
    }
    %c0_16 = arith.constant 0 : index
    %c0_17 = arith.constant 0 : index
    %23 = vector.load %arg12[%c0_16, %c0_17] : memref<8x32xf32, #tpu.memory_space<vmem>>, vector<8x32xf32>
    %24 = arith.maximumf %23, %19 : vector<8x32xf32>
    %c0_18 = arith.constant 0 : index
    %c0_19 = arith.constant 0 : index
    %25 = vector.load %arg12[%c0_18, %c0_19] : memref<8x32xf32, #tpu.memory_space<vmem>>, vector<8x32xf32>
    tpu.vector_store %arg12[%c0_18, %c0_19], %24 {strides = array<i32>} : memref<8x32xf32, #tpu.memory_space<vmem>>, vector<8x32xf32>,
    %c0_i32_20 = arith.constant 0 : i32
    %26 = arith.cmpi eq, %arg2, %c0_i32_20 : i32
    %27 = arith.extui %26 : i1 to i32
    %c0_i32_21 = arith.constant 0 : i32
    %28 = arith.cmpi ne, %27, %c0_i32_21 : i32
    scf.if %28 {
      %c0_22 = arith.constant 0 : index
      %c0_23 = arith.constant 0 : index
      %29 = vector.load %arg12[%c0_22, %c0_23] : memref<8x32xf32, #tpu.memory_space<vmem>>, vector<8x32xf32>
      %c0_24 = arith.constant 0 : index
      %c0_25 = arith.constant 0 : index
      %c0_26 = arith.constant 0 : index
      %30 = vector.load %arg4[%c0_24, %c0_25, %c0_26] : memref<1x8x7xbf16, #tpu.memory_space<vmem>>, vector<1x8x7xbf16>
      %31 = vector.shape_cast %30 : vector<1x8x7xbf16> to vector<8x7xbf16>
      %c0_27 = arith.constant 0 : index
      %c0_28 = arith.constant 0 : index
      %32 = vector.load %arg9[%c0_27, %c0_28] : memref<7x32xbf16, #tpu.memory_space<vmem>>, vector<7x32xbf16>
      %c0_29 = arith.constant 0 : index
      %c0_30 = arith.constant 0 : index
      %33 = vector.load %arg10[%c0_29, %c0_30] : memref<1x32xf32, #tpu.memory_space<vmem>>, vector<1x32xf32>
      %cst_31 = arith.constant dense<0.000000e+00> : vector<8x32xf32>
      %34 = tpu.matmul %31, %32, %cst_31 {dimension_numbers = #tpu.dot_dimension_numbers<[1], [0], [0], [1], [0, 0, 1, 1], [], []>} : vector<8x7xbf16>, vector<7x32xbf16>, vector<8x32xf32> -> vector<8x32xf32>
      %35 = vector.broadcast %33 : vector<1x32xf32> to vector<8x32xf32>
      %36 = arith.addf %34, %35 : vector<8x32xf32>
      %cst_32 = arith.constant 0.000000e+00 : f32
      %37 = vector.broadcast %cst_32 : f32 to vector<8x32xf32>
      %38 = arith.maximumf %36, %37 : vector<8x32xf32>
      %39 = arith.addf %29, %38 : vector<8x32xf32>
      %40 = vector.shape_cast %39 : vector<8x32xf32> to vector<1x8x32xf32>
      %c0_33 = arith.constant 0 : index
      %c0_34 = arith.constant 0 : index
      %c0_35 = arith.constant 0 : index
      %41 = vector.load %arg11[%c0_33, %c0_34, %c0_35] : memref<1x8x32xf32, #tpu.memory_space<vmem>>, vector<1x8x32xf32>
      tpu.vector_store %arg11[%c0_33, %c0_34, %c0_35], %40 {strides = array<i32>} : memref<1x8x32xf32, #tpu.memory_space<vmem>>, vector<1x8x32xf32>,
    } else {
    }
    return
  }
  func.func @transform_0(%arg0: i32, %arg1: i32, %arg2: i32) -> (i32, i32, i32, i32) {
    %c0_i32 = arith.constant 0 : i32
    %c0_i32_0 = arith.constant 0 : i32
    return %arg0, %arg1, %arg2, %c0_i32 : i32, i32, i32, i32
  }
  func.func @transform_1(%arg0: i32, %arg1: i32, %arg2: i32) -> (i32, i32, i32) {
    %c0_i32 = arith.constant 0 : i32
    %c0_i32_0 = arith.constant 0 : i32
    return %arg0, %arg1, %c0_i32 : i32, i32, i32
  }
  func.func @transform_2(%arg0: i32, %arg1: i32, %arg2: i32) -> (i32, i32) {
    %c0_i32 = arith.constant 0 : i32
    %c0_i32_0 = arith.constant 0 : i32
    %c0_i32_1 = arith.constant 0 : i32
    return %c0_i32, %c0_i32_0 : i32, i32
  }
  func.func @transform_3(%arg0: i32, %arg1: i32, %arg2: i32) -> (i32, i32) {
    %c0_i32 = arith.constant 0 : i32
    %c0_i32_0 = arith.constant 0 : i32
    %c0_i32_1 = arith.constant 0 : i32
    return %c0_i32, %c0_i32_0 : i32, i32
  }
  func.func @transform_4(%arg0: i32, %arg1: i32, %arg2: i32) -> (i32, i32) {
    %c0_i32 = arith.constant 0 : i32
    %c0_i32_0 = arith.constant 0 : i32
    %c0_i32_1 = arith.constant 0 : i32
    return %c0_i32, %c0_i32_0 : i32, i32
  }
  func.func @transform_5(%arg0: i32, %arg1: i32, %arg2: i32) -> (i32, i32) {
    %c0_i32 = arith.constant 0 : i32
    %c0_i32_0 = arith.constant 0 : i32
    %c0_i32_1 = arith.constant 0 : i32
    return %c0_i32, %c0_i32_0 : i32, i32
  }
  func.func @transform_6(%arg0: i32, %arg1: i32, %arg2: i32) -> (i32, i32) {
    %c0_i32 = arith.constant 0 : i32
    %c0_i32_0 = arith.constant 0 : i32
    %c0_i32_1 = arith.constant 0 : i32
    return %c0_i32, %c0_i32_0 : i32, i32
  }
  func.func @transform_7(%arg0: i32, %arg1: i32, %arg2: i32) -> (i32, i32) {
    %c0_i32 = arith.constant 0 : i32
    %c0_i32_0 = arith.constant 0 : i32
    %c0_i32_1 = arith.constant 0 : i32
    return %c0_i32, %c0_i32_0 : i32, i32
  }
  func.func @transform_8(%arg0: i32, %arg1: i32, %arg2: i32) -> (i32, i32, i32) {
    %c0_i32 = arith.constant 0 : i32
    %c0_i32_0 = arith.constant 0 : i32
    return %arg0, %arg1, %c0_i32 : i32, i32, i32
  }
}

</mosaic_0001>

<llo_original>
// kernel: tpu_custom_call.1
$region0: #{tpu_custom_call.1}
  #allocation0 [shape = 'u32[]', space=smem, size = 0x4, offset = 0x4, fixed_abs, tag = 'smem constant byte address 0x4 - core index']
  #allocation1 [shape = 'u32[144,128]{1,0:T(1,128)}', space=vmem, size = 0x12000, scoped, tag = 'internal scratch']
  #allocation2 [shape = 'f32[8,32]{1,0:T(8,128)}', space=vmem, size = 0x1000, scoped, tag = 'scratch operand']
  %s0 = inlined_call_operand.vmem [shape: bf16[2,8,8,7], index: 0, kind: input, shape index: {}]
  %s1 = inlined_call_operand.vmem [shape: bf16[2,8,7], index: 1, kind: input, shape index: {}]
  %s2 = inlined_call_operand.vmem [shape: bf16[7,16], index: 2, kind: input, shape index: {}]
  %s3 = inlined_call_operand.vmem [shape: f32[1,16], index: 3, kind: input, shape index: {}]
  %s4 = inlined_call_operand.vmem [shape: bf16[16,32], index: 4, kind: input, shape index: {}]
  %s5 = inlined_call_operand.vmem [shape: f32[1,32], index: 5, kind: input, shape index: {}]
  %s6 = inlined_call_operand.vmem [shape: bf16[7,32], index: 6, kind: input, shape index: {}]
  %s7 = inlined_call_operand.vmem [shape: f32[1,32], index: 7, kind: input, shape index: {}]
  %s8 = inlined_call_operand.hbm [shape: f32[2,8,32], index: 8, kind: output, shape index: {}]
  %s9 = sld [smem:[#allocation0]]
  $region73: #{tpu_custom_call.1} parent=0
    _
  %s11 = ssub.s32 1, %s9
  %s12 = scalar_select 0, %s11, %s9
  $region1: #{tpu_custom_call.1} parent=0
    #allocation3 [shape = 'u8[8192]{0}', space=vmem, size = 0x2000, scoped, tag = 'output window, operand 0']
    #allocation4 [shape = 's32[2]{0}', space=sflag, size = 0x8, scoped, tag = 'scoped memory for tpu_custom_call.1']
    %13 = vsyncpa [#allocation4], 0
    %s14 = scalar_lea.sflag [#allocation4], 1
    %15 = vsyncpa %s14, 0
    loop: start=0, step=1, limit=4
    $region2: #{tpu_custom_call.1} parent=1 // loop_pre_header
      _
    $region3: #{tpu_custom_call.1} parent=1 // loop_header
      %s17 = sphi 0, %s21
      %p18 = scmp.ge.s32.totalorder %s17, 4
      %s24 = sphi 0, %s43
      %s25 = sphi 0, %s39
      %s26 = sphi 0, %s35
      %s27 = sphi 0, %s24
      %s28 = sphi 0, %s25
      %s29 = sphi 0, %s26
      %s30 = sphi 0, %s27
      %s31 = sphi 0, %s28
      %s32 = sphi 0, %s29
      %s50 = sphi 0, %s52
      %s53 = sphi 0, %s50
      %s54 = sphi 0, %s53
      %s70 = sphi 0, %s54
      %s78 = sphi 0, %s80
      %s81 = sphi 0, %s78
      %s82 = sphi 0, %s81
      %s98 = sphi 0, %s82
      %s102 = sphi 0, %s102
      %s104 = sphi 0, %s102
      %s105 = sphi 0, %s104
      %s119 = sphi 0, %s105
      %s123 = sphi 0, %s123
      %s125 = sphi 0, %s123
      %s126 = sphi 0, %s125
      %s140 = sphi 0, %s126
      %s144 = sphi 0, %s144
      %s146 = sphi 0, %s144
      %s147 = sphi 0, %s146
      %s161 = sphi 0, %s147
      %s165 = sphi 0, %s165
      %s167 = sphi 0, %s165
      %s168 = sphi 0, %s167
      %s182 = sphi 0, %s168
      %s186 = sphi 0, %s186
      %s188 = sphi 0, %s186
      %s189 = sphi 0, %s188
      %s203 = sphi 0, %s189
      %s207 = sphi 0, %s207
      %s209 = sphi 0, %s207
      %s210 = sphi 0, %s209
      %s224 = sphi 0, %s210
      %s232 = sphi 0, %s234
      %s235 = sphi 0, %s232
      %s236 = sphi 0, %s235
      %s252 = sphi 0, %s236
    $region4: #{tpu_custom_call.1} parent=1 // loop_header_branch
      %20 = sbr.rel (%p18) target = $region8
    $region5: #{tpu_custom_call.1} parent=1 // loop_body
      %s22 = ssub.s32 %s17, 1
      %s23 = ssub.s32 %s17, 2
      %s33 = sadd.s32 1, %s26
      %p34 = scmp.ge.s32.totalorder %s33, 1
      %s35 = scalar_select %p34, 0, %s33
      %s36 = sadd.s32 1, %s25
      %s37 = scalar_select %p34, %s36, %s25
      %p38 = scmp.ge.s32.totalorder %s37, 1
      %s39 = scalar_select %p38, 0, %s37
      %s40 = sadd.s32 1, %s24
      %s41 = scalar_select %p38, %s40, %s24
      %p42 = scmp.ge.s32.totalorder %s41, 2
      %s43 = scalar_select %p42, 0, %s41
      %s44 = ssub.s32 %s24, %s43
      %s45 = ssub.s32 %s25, %s39
      %s46 = sor.u32 %s44, %s45
      %s47 = ssub.s32 %s26, %s35
      %s48 = sor.u32 %s46, %s47
      %p49 = scmp.eq.s32.totalorder %s48, 0
      %s51 = sadd.s32 %s50, 1
      %s52 = scalar_select %p49, %s50, %s51
      %p55 = pneg %p49
      %p56 = scmp.eq.s32.totalorder %s17, 1
      %p57 = por %p55, %p56
      %p58 = scmp.ne.s32.totalorder %s50, %s53
      %p59 = scmp.eq.s32.totalorder %s17, 0
      %p60 = por %p58, %p59
      %p61 = scmp.ne.s32.totalorder %s50, %s53
      %p62 = scmp.eq.s32.totalorder %s22, 1
      %p63 = por %p61, %p62
      %p64 = scmp.ne.s32.totalorder %s53, %s54
      %p65 = scmp.eq.s32.totalorder %s22, 0
      %p66 = por %p64, %p65
      %p67 = scmp.ne.s32.totalorder %s53, %s54
      %p68 = scmp.eq.s32.totalorder %s23, 1
      %p69 = por %p67, %p68
      %p71 = scmp.ne.s32.totalorder %s54, %s70
      %p72 = scmp.eq.s32.totalorder %s23, 0
      %p73 = por %p71, %p72
      %s74 = ssub.s32 %s24, %s43
      %s75 = ssub.s32 %s25, %s39
      %s76 = sor.u32 %s74, %s75
      %p77 = scmp.eq.s32.totalorder %s76, 0
      %s79 = sadd.s32 %s78, 1
      %s80 = scalar_select %p77, %s78, %s79
      %p83 = pneg %p77
      %p84 = scmp.eq.s32.totalorder %s17, 1
      %p85 = por %p83, %p84
      %p86 = scmp.ne.s32.totalorder %s78, %s81
      %p87 = scmp.eq.s32.totalorder %s17, 0
      %p88 = por %p86, %p87
      %p89 = scmp.ne.s32.totalorder %s78, %s81
      %p90 = scmp.eq.s32.totalorder %s22, 1
      %p91 = por %p89, %p90
      %p92 = scmp.ne.s32.totalorder %s81, %s82
      %p93 = scmp.eq.s32.totalorder %s22, 0
      %p94 = por %p92, %p93
      %p95 = scmp.ne.s32.totalorder %s81, %s82
      %p96 = scmp.eq.s32.totalorder %s23, 1
      %p97 = por %p95, %p96
      %p99 = scmp.ne.s32.totalorder %s82, %s98
      %p100 = scmp.eq.s32.totalorder %s23, 0
      %p101 = por %p99, %p100
      %s103 = sadd.s32 %s102, 1
      %p106 = scmp.eq.s32.totalorder %s17, 1
      %p107 = scmp.ne.s32.totalorder %s102, %s104
      %p108 = scmp.eq.s32.totalorder %s17, 0
      %p109 = por %p107, %p108
      %p110 = scmp.ne.s32.totalorder %s102, %s104
      %p111 = scmp.eq.s32.totalorder %s22, 1
      %p112 = por %p110, %p111
      %p113 = scmp.ne.s32.totalorder %s104, %s105
      %p114 = scmp.eq.s32.totalorder %s22, 0
      %p115 = por %p113, %p114
      %p116 = scmp.ne.s32.totalorder %s104, %s105
      %p117 = scmp.eq.s32.totalorder %s23, 1
      %p118 = por %p116, %p117
      %p120 = scmp.ne.s32.totalorder %s105, %s119
      %p121 = scmp.eq.s32.totalorder %s23, 0
      %p122 = por %p120, %p121
      %s124 = sadd.s32 %s123, 1
      %p127 = scmp.eq.s32.totalorder %s17, 1
      %p128 = scmp.ne.s32.totalorder %s123, %s125
      %p129 = scmp.eq.s32.totalorder %s17, 0
      %p130 = por %p128, %p129
      %p131 = scmp.ne.s32.totalorder %s123, %s125
      %p132 = scmp.eq.s32.totalorder %s22, 1
      %p133 = por %p131, %p132
      %p134 = scmp.ne.s32.totalorder %s125, %s126
      %p135 = scmp.eq.s32.totalorder %s22, 0
      %p136 = por %p134, %p135
      %p137 = scmp.ne.s32.totalorder %s125, %s126
      %p138 = scmp.eq.s32.totalorder %s23, 1
      %p139 = por %p137, %p138
      %p141 = scmp.ne.s32.totalorder %s126, %s140
      %p142 = scmp.eq.s32.totalorder %s23, 0
      %p143 = por %p141, %p142
      %s145 = sadd.s32 %s144, 1
      %p148 = scmp.eq.s32.totalorder %s17, 1
      %p149 = scmp.ne.s32.totalorder %s144, %s146
      %p150 = scmp.eq.s32.totalorder %s17, 0
      %p151 = por %p149, %p150
      %p152 = scmp.ne.s32.totalorder %s144, %s146
      %p153 = scmp.eq.s32.totalorder %s22, 1
      %p154 = por %p152, %p153
      %p155 = scmp.ne.s32.totalorder %s146, %s147
      %p156 = scmp.eq.s32.totalorder %s22, 0
      %p157 = por %p155, %p156
      %p158 = scmp.ne.s32.totalorder %s146, %s147
      %p159 = scmp.eq.s32.totalorder %s23, 1
      %p160 = por %p158, %p159
      %p162 = scmp.ne.s32.totalorder %s147, %s161
      %p163 = scmp.eq.s32.totalorder %s23, 0
      %p164 = por %p162, %p163
      %s166 = sadd.s32 %s165, 1
      %p169 = scmp.eq.s32.totalorder %s17, 1
      %p170 = scmp.ne.s32.totalorder %s165, %s167
      %p171 = scmp.eq.s32.totalorder %s17, 0
      %p172 = por %p170, %p171
      %p173 = scmp.ne.s32.totalorder %s165, %s167
      %p174 = scmp.eq.s32.totalorder %s22, 1
      %p175 = por %p173, %p174
      %p176 = scmp.ne.s32.totalorder %s167, %s168
      %p177 = scmp.eq.s32.totalorder %s22, 0
      %p178 = por %p176, %p177
      %p179 = scmp.ne.s32.totalorder %s167, %s168
      %p180 = scmp.eq.s32.totalorder %s23, 1
      %p181 = por %p179, %p180
      %p183 = scmp.ne.s32.totalorder %s168, %s182
      %p184 = scmp.eq.s32.totalorder %s23, 0
      %p185 = por %p183, %p184
      %s187 = sadd.s32 %s186, 1
      %p190 = scmp.eq.s32.totalorder %s17, 1
      %p191 = scmp.ne.s32.totalorder %s186, %s188
      %p192 = scmp.eq.s32.totalorder %s17, 0
      %p193 = por %p191, %p192
      %p194 = scmp.ne.s32.totalorder %s186, %s188
      %p195 = scmp.eq.s32.totalorder %s22, 1
      %p196 = por %p194, %p195
      %p197 = scmp.ne.s32.totalorder %s188, %s189
      %p198 = scmp.eq.s32.totalorder %s22, 0
      %p199 = por %p197, %p198
      %p200 = scmp.ne.s32.totalorder %s188, %s189
      %p201 = scmp.eq.s32.totalorder %s23, 1
      %p202 = por %p200, %p201
      %p204 = scmp.ne.s32.totalorder %s189, %s203
      %p205 = scmp.eq.s32.totalorder %s23, 0
      %p206 = por %p204, %p205
      %s208 = sadd.s32 %s207, 1
      %p211 = scmp.eq.s32.totalorder %s17, 1
      %p212 = scmp.ne.s32.totalorder %s207, %s209
      %p213 = scmp.eq.s32.totalorder %s17, 0
      %p214 = por %p212, %p213
      %p215 = scmp.ne.s32.totalorder %s207, %s209
      %p216 = scmp.eq.s32.totalorder %s22, 1
      %p217 = por %p215, %p216
      %p218 = scmp.ne.s32.totalorder %s209, %s210
      %p219 = scmp.eq.s32.totalorder %s22, 0
      %p220 = por %p218, %p219
      %p221 = scmp.ne.s32.totalorder %s209, %s210
      %p222 = scmp.eq.s32.totalorder %s23, 1
      %p223 = por %p221, %p222
      %p225 = scmp.ne.s32.totalorder %s210, %s224
      %p226 = scmp.eq.s32.totalorder %s23, 0
      %p227 = por %p225, %p226
      %s228 = ssub.s32 %s24, %s43
      %s229 = ssub.s32 %s25, %s39
      %s230 = sor.u32 %s228, %s229
      %p231 = scmp.eq.s32.totalorder %s230, 0
      %s233 = sadd.s32 %s232, 1
      %s234 = scalar_select %p231, %s232, %s233
      %p237 = pneg %p231
      %p238 = scmp.eq.s32.totalorder %s17, 1
      %p239 = por %p237, %p238
      %p240 = scmp.ne.s32.totalorder %s232, %s235
      %p241 = scmp.eq.s32.totalorder %s17, 0
      %p242 = por %p240, %p241
      %p243 = scmp.ne.s32.totalorder %s232, %s235
      %p244 = scmp.eq.s32.totalorder %s22, 1
      %p245 = por %p243, %p244
      %p246 = scmp.ne.s32.totalorder %s235, %s236
      %p247 = scmp.eq.s32.totalorder %s22, 0
      %p248 = por %p246, %p247
      %p249 = scmp.ne.s32.totalorder %s235, %s236
      %p250 = scmp.eq.s32.totalorder %s23, 1
      %p251 = por %p249, %p250
      %p253 = scmp.ne.s32.totalorder %s236, %s252
      %p254 = scmp.eq.s32.totalorder %s23, 0
      %p255 = por %p253, %p254
      %p256 = scmp.le.s32.totalorder 1, %s17
      %p257 = scmp.lt.s32.totalorder %s17, 3
      %p258 = pnand %p256, %p257
      %p259 = pneg %p258
      // Predicated region
      $region9: #{tpu_custom_call.1} parent=5 // pred_check
        _
      $region10: #{tpu_custom_call.1} parent=5 // pred_check_branch
        %261 = sbr.rel (%p258) target = $region12
      $region11: #{tpu_custom_call.1} parent=5 // pred_region
        %s262 = ssub.s32 %s17, 1
        // Predicated region
        $region13: #{tpu_custom_call.1} parent=11 // pred_check
          %p263 = pneg %p115
        $region14: #{tpu_custom_call.1} parent=11 // pred_check_branch
          %265 = sbr.rel (%p263) target = $region16
        $region15: #{tpu_custom_call.1} parent=11 // pred_region
          _
        $region16: #{tpu_custom_call.1} parent=11 // pred_fallthru
          _
        // Predicated region
        $region17: #{tpu_custom_call.1} parent=11 // pred_check
          %p266 = pneg %p136
        $region18: #{tpu_custom_call.1} parent=11 // pred_check_branch
          %268 = sbr.rel (%p266) target = $region20
        $region19: #{tpu_custom_call.1} parent=11 // pred_region
          _
        $region20: #{tpu_custom_call.1} parent=11 // pred_fallthru
          _
        // Predicated region
        $region21: #{tpu_custom_call.1} parent=11 // pred_check
          %p269 = pneg %p157
        $region22: #{tpu_custom_call.1} parent=11 // pred_check_branch
          %271 = sbr.rel (%p269) target = $region24
        $region23: #{tpu_custom_call.1} parent=11 // pred_region
          _
        $region24: #{tpu_custom_call.1} parent=11 // pred_fallthru
          _
        // Predicated region
        $region25: #{tpu_custom_call.1} parent=11 // pred_check
          %p272 = pneg %p178
        $region26: #{tpu_custom_call.1} parent=11 // pred_check_branch
          %274 = sbr.rel (%p272) target = $region28
        $region27: #{tpu_custom_call.1} parent=11 // pred_region
          _
        $region28: #{tpu_custom_call.1} parent=11 // pred_fallthru
          _
        // Predicated region
        $region29: #{tpu_custom_call.1} parent=11 // pred_check
          %p275 = pneg %p199
        $region30: #{tpu_custom_call.1} parent=11 // pred_check_branch
          %277 = sbr.rel (%p275) target = $region32
        $region31: #{tpu_custom_call.1} parent=11 // pred_region
          _
        $region32: #{tpu_custom_call.1} parent=11 // pred_fallthru
          _
        // Predicated region
        $region33: #{tpu_custom_call.1} parent=11 // pred_check
          %p278 = pneg %p220
        $region34: #{tpu_custom_call.1} parent=11 // pred_check_branch
          %280 = sbr.rel (%p278) target = $region36
        $region35: #{tpu_custom_call.1} parent=11 // pred_region
          _
        $region36: #{tpu_custom_call.1} parent=11 // pred_fallthru
          _
      $region12: #{tpu_custom_call.1} parent=5 // pred_fallthru
        _
      %p281 = scmp.lt.s32.totalorder %s17, 2
      // Predicated region
      $region37: #{tpu_custom_call.1} parent=5 // pred_check
        %p282 = pneg %p281
      $region38: #{tpu_custom_call.1} parent=5 // pred_check_branch
        %284 = sbr.rel (%p282) target = $region40
      $region39: #{tpu_custom_call.1} parent=5 // pred_region
        // Predicated region
        $region41: #{tpu_custom_call.1} parent=39 // pred_check
          %p285 = pneg %p60
        $region42: #{tpu_custom_call.1} parent=39 // pred_check_branch
          %287 = sbr.rel (%p285) target = $region44
        $region43: #{tpu_custom_call.1} parent=39 // pred_region
          %s288 = smul.u32 8, %s25
          %p289 = scmp.lt.s32.totalorder %s24, 1
          %s290 = scalar_select %p289, %s24, 1
          %p291 = scmp.lt.s32.totalorder %s288, 7
          %s292 = scalar_select %p291, %s288, 7
          %p293 = scmp.lt.s32.totalorder %s26, 0
          %s294 = scalar_select %p293, %s26, 0
          %s295 = sadd.s32 %s294, %s292
          %s296 = smul.addr %s290, 8
          %s297 = sadd.s32 %s295, %s296
          %s298 = smul.addr %s297, 4
          %s299 = scalar_lea.vmem %s0, %s298
          %s300 = smul.u32 8, %s25
        $region44: #{tpu_custom_call.1} parent=39 // pred_fallthru
          _
        // Predicated region
        $region45: #{tpu_custom_call.1} parent=39 // pred_check
          %p301 = pneg %p88
        $region46: #{tpu_custom_call.1} parent=39 // pred_check_branch
          %303 = sbr.rel (%p301) target = $region48
        $region47: #{tpu_custom_call.1} parent=39 // pred_region
          %p304 = scmp.lt.s32.totalorder %s24, 1
          %s305 = scalar_select %p304, %s24, 1
          %p306 = scmp.lt.s32.totalorder %s25, 0
          %s307 = scalar_select %p306, %s25, 0
          %s308 = sadd.s32 %s307, %s305
          %s309 = smul.addr %s308, 4
          %s310 = scalar_lea.vmem %s1, %s309
        $region48: #{tpu_custom_call.1} parent=39 // pred_fallthru
          _
      $region40: #{tpu_custom_call.1} parent=5 // pred_fallthru
        _
      %p311 = scmp.le.s32.totalorder 1, %s17
      %p312 = scmp.lt.s32.totalorder %s17, 3
      %p313 = pnand %p311, %p312
      %p314 = pneg %p313
      // Predicated region
      $region49: #{tpu_custom_call.1} parent=5 // pred_check
        _
      $region50: #{tpu_custom_call.1} parent=5 // pred_check_branch
        %316 = sbr.rel (%p313) target = $region52
      $region51: #{tpu_custom_call.1} parent=5 // pred_region
        %s317 = ssub.s32 %s17, 1
        %s318 = smul.u32 8, %s28
        %p319 = scmp.lt.s32.totalorder %s27, 1
        %s320 = scalar_select %p319, %s27, 1
        %p321 = scmp.lt.s32.totalorder %s318, 7
        %s322 = scalar_select %p321, %s318, 7
        %p323 = scmp.lt.s32.totalorder %s29, 0
        %s324 = scalar_select %p323, %s29, 0
        %s325 = sadd.s32 %s324, %s322
        %s326 = smul.addr %s320, 8
        %s327 = sadd.s32 %s325, %s326
        %s328 = smul.addr %s327, 4
        %s329 = scalar_lea.vmem %s0, %s328
        %p330 = pneg %p66
        %p331 = pneg %p63
        %p332 = scmp.lt.s32.totalorder %s27, 1
        %s333 = scalar_select %p332, %s27, 1
        %p334 = scmp.lt.s32.totalorder %s28, 0
        %s335 = scalar_select %p334, %s28, 0
        %s336 = sadd.s32 %s335, %s333
        %s337 = smul.addr %s336, 4
        %s338 = scalar_lea.vmem %s1, %s337
        %p339 = pneg %p94
        %p340 = pneg %p91
        %p341 = pneg %p115
        %p342 = pneg %p112
        %p343 = pneg %p136
        %p344 = pneg %p133
        %p345 = pneg %p157
        %p346 = pneg %p154
        %p347 = pneg %p178
        %p348 = pneg %p175
        %p349 = pneg %p199
        %p350 = pneg %p196
        %p351 = pneg %p220
        %p352 = pneg %p217
        %p353 = pneg %p248
        %p354 = pneg %p245
        %s355 = sand.u32 %s235, 1
        %s356 = scalar_lea.sflag [#allocation4], %s355
        %s357 = sand.u32 %s235, 1
        %s358 = smul.addr %s357, 8
        %s359 = scalar_lea.vmem [#allocation3], %s358
        %s360 = smul.u32 8, %s28
        %p361 = scmp.lt.s32.totalorder %s27, 1
        %s362 = scalar_select %p361, %s27, 1
        %p363 = scmp.lt.s32.totalorder %s360, 7
        %s364 = scalar_select %p363, %s360, 7
        %p365 = scmp.lt.s32.totalorder %s29, 0
        %s366 = scalar_select %p365, %s29, 0
        %s367 = sadd.s32 %s366, %s364
        %s368 = smul.addr %s362, 8
        %s369 = sadd.s32 %s367, %s368
        %s370 = smul.addr %s369, 4
        %s371 = scalar_lea.vmem %s0, %s370
        %s372 = smul.u32 8, %s28
        %p373 = scmp.lt.s32.totalorder %s27, 1
        %s374 = scalar_select %p373, %s27, 1
        %p375 = scmp.lt.s32.totalorder %s28, 0
        %s376 = scalar_select %p375, %s28, 0
        %s377 = sadd.s32 %s376, %s374
        %s378 = smul.addr %s377, 4
        %s379 = scalar_lea.vmem %s1, %s378
        %v381 = vld [vmem:[%s371] sm:$0xf]
        %v382 = vld [vmem:[%s371 + $0x4] sm:$0xf]
        %v383 = vld [vmem:[%s371 + $0x8] sm:$0xf]
        %v384 = vld [vmem:[%s371 + $0xc] sm:$0xf]
        %v385 = vld [vmem:[%s371 + $0x10] sm:$0xf]
        %v386 = vld [vmem:[%s371 + $0x14] sm:$0xf]
        %v387 = vld [vmem:[%s371 + $0x18] sm:$0xf]
        %v388 = vld [vmem:[%s371 + $0x1c] sm:$0xf]
        %v389 = vld [vmem:[%s2] sm:$0xf]
        %v390 = vld [vmem:[%s3] sm:$0x1]
        %v392 = vlaneseq
        %v393 = vshrl.u32 %v392, 7
        %v394 = vsub.s32 0, %v393
        %v395 = vrot.slane %v390, %v394
        %v405 = vunpack.c.l.b16 %v381
        %v406 = vunpack.c.l.b16 %v382
        %v407 = vunpack.c.l.b16 %v383
        %v408 = vunpack.c.l.b16 %v384
        %v409 = vunpack.c.l.b16 %v385
        %v410 = vunpack.c.l.b16 %v386
        %v411 = vunpack.c.l.b16 %v387
        %v412 = vunpack.c.l.b16 %v388
        %v413 = vpack.c.b16 %v406, %v405
        %v414 = vpack.c.b16 %v408, %v407
        %v415 = vpack.c.b16 %v410, %v409
        %v416 = vpack.c.b16 %v412, %v411
        %vm417 = vcmask 56320
        %v419 = vsel %vm417, %v413, 0
        %v422 = vsel %vm417, %v414, 0
        %v425 = vsel %vm417, %v415, 0
        %v428 = vsel %vm417, %v416, 0
        %vm430 = vcmask 1042432
        %vm431 = vcmask 1043456
        %v432 = vsel %vm430, 4294967295, 65535
        %v433 = vsel %vm431, %v432, 0
        %v435 = vand.u32 %v389, %v433
        %437 = vmatprep.subr.bf16.mxu0 0
        %438 = vmatpush1.bf16.msra.mxu0 %v435
        %439 = vmatprep.subr.bf16.mxu0 0
        %440 = vmatpush1.bf16.msra.mxu0 0
        %441 = vmatprep.subr.bf16.mxu0 0
        %442 = vmatpush1.bf16.msra.mxu0 0
        %443 = vmatprep.subr.bf16.mxu0 0
        %444 = vmatpush1.bf16.msra.mxu0 0
        %445 = vmatprep.subr.bf16.mxu0 0
        %446 = vmatpush1.bf16.msra.mxu0 0
        %447 = vmatprep.subr.bf16.mxu0 0
        %448 = vmatpush1.bf16.msra.mxu0 0
        %449 = vmatprep.subr.bf16.mxu0 0
        %450 = vmatpush1.bf16.msra.mxu0 0
        %451 = vmatprep.subr.bf16.mxu0 0
        %452 = vmatpush1.bf16.msra.mxu0 0
        %453 = vmatprep.subr.bf16.mxu0 0
        %454 = vmatpush1.bf16.msra.mxu0 0
        %455 = vmatprep.subr.bf16.mxu0 0
        %456 = vmatpush1.bf16.msra.mxu0 0
        %457 = vmatprep.subr.bf16.mxu0 0
        %458 = vmatpush1.bf16.msra.mxu0 0
        %459 = vmatprep.subr.bf16.mxu0 0
        %460 = vmatpush1.bf16.msra.mxu0 0
        %461 = vmatprep.subr.bf16.mxu0 0
        %462 = vmatpush1.bf16.msra.mxu0 0
        %463 = vmatprep.subr.bf16.mxu0 0
        %464 = vmatpush1.bf16.msra.mxu0 0
        %465 = vmatprep.subr.bf16.mxu0 0
        %466 = vmatpush1.bf16.msra.mxu0 0
        %467 = vmatprep.subr.bf16.mxu0 0
        %468 = vmatpush1.bf16.msra.mxu0 0
        %469 = vmatprep.mubr.bf16.mxu0 0
        %470 = vmatmul.mubr.bf16.gmra.mrb[0].mxu0 %v419
        %v471 = vpop.f32.mrb[0].mxu0
        %v472 = vadd.f32 %v395, %v471
        %v473 = vpop.f32.mrb[0].mxu0
        %v474 = vpop.f32.mrb[0].mxu0
        %v475 = vadd.f32 %v395, %v474
        %v476 = vpop.f32.mrb[0].mxu0
        %477 = vmatprep.mubr.bf16.mxu0 0
        %478 = vmatmul.mubr.bf16.gmra.mrb[0].mxu0 %v422
        %v479 = vpop.f32.mrb[0].mxu0
        %v480 = vadd.f32 %v395, %v479
        %v481 = vpop.f32.mrb[0].mxu0
        %v482 = vpop.f32.mrb[0].mxu0
        %v483 = vadd.f32 %v395, %v482
        %v484 = vpop.f32.mrb[0].mxu0
        %485 = vmatprep.mubr.bf16.mxu0 0
        %486 = vmatmul.mubr.bf16.gmra.mrb[0].mxu0 %v425
        %v487 = vpop.f32.mrb[0].mxu0
        %v488 = vadd.f32 %v395, %v487
        %v489 = vpop.f32.mrb[0].mxu0
        %v490 = vpop.f32.mrb[0].mxu0
        %v491 = vadd.f32 %v395, %v490
        %v492 = vpop.f32.mrb[0].mxu0
        %493 = vmatprep.mubr.bf16.mxu0 0
        %494 = vmatmul.mubr.bf16.gmra.mrb[0].mxu0 %v428
        %v495 = vpop.f32.mrb[0].mxu0
        %v496 = vadd.f32 %v395, %v495
        %v497 = vpop.f32.mrb[0].mxu0
        %v498 = vpop.f32.mrb[0].mxu0
        %v499 = vadd.f32 %v395, %v498
        %v500 = vpop.f32.mrb[0].mxu0
        %501 = vdwg.mxu0
        %v502 = vmax.f32 %v472, 0.0
        %v503 = vmax.f32 %v475, 0.0
        %v504 = vmax.f32 %v480, 0.0
        %v505 = vmax.f32 %v483, 0.0
        %v506 = vmax.f32 %v488, 0.0
        %v507 = vmax.f32 %v491, 0.0
        %v508 = vmax.f32 %v496, 0.0
        %v509 = vmax.f32 %v499, 0.0
        %v510 = vpack.c.bf16 %v503, %v502
        %v511 = vpack.c.bf16 %v505, %v504
        %v512 = vpack.c.bf16 %v507, %v506
        %v513 = vpack.c.bf16 %v509, %v508
        %v514 = vld [vmem:[%s4] sm:$0xf]
        %v515 = vld [vmem:[%s4 + $0x4] sm:$0xf]
        %v516 = vld [vmem:[%s5] sm:$0x1]
        %v518 = vlaneseq
        %v519 = vshrl.u32 %v518, 7
        %v520 = vsub.s32 0, %v519
        %v521 = vrot.slane %v516, %v520
        %v525 = vunpack.c.l.b16 %v514
        %v526 = vunpack.c.l.b16 %v515
        %v527 = vpack.c.b16 %v526, %v525
        %vm529 = vcmask 130048
        %v531 = vsel %vm529, %v510, 0
        %v534 = vsel %vm529, %v511, 0
        %v537 = vsel %vm529, %v512, 0
        %v540 = vsel %vm529, %v513, 0
        %542 = vmatprep.subr.bf16.mxu0 0
        %543 = vmatpush1.bf16.msra.mxu0 %v527
        %544 = vmatprep.subr.bf16.mxu0 0
        %545 = vmatpush1.bf16.msra.mxu0 0
        %546 = vmatprep.subr.bf16.mxu0 0
        %547 = vmatpush1.bf16.msra.mxu0 0
        %548 = vmatprep.subr.bf16.mxu0 0
        %549 = vmatpush1.bf16.msra.mxu0 0
        %550 = vmatprep.subr.bf16.mxu0 0
        %551 = vmatpush1.bf16.msra.mxu0 0
        %552 = vmatprep.subr.bf16.mxu0 0
        %553 = vmatpush1.bf16.msra.mxu0 0
        %554 = vmatprep.subr.bf16.mxu0 0
        %555 = vmatpush1.bf16.msra.mxu0 0
        %556 = vmatprep.subr.bf16.mxu0 0
        %557 = vmatpush1.bf16.msra.mxu0 0
        %558 = vmatprep.subr.bf16.mxu0 0
        %559 = vmatpush1.bf16.msra.mxu0 0
        %560 = vmatprep.subr.bf16.mxu0 0
        %561 = vmatpush1.bf16.msra.mxu0 0
        %562 = vmatprep.subr.bf16.mxu0 0
        %563 = vmatpush1.bf16.msra.mxu0 0
        %564 = vmatprep.subr.bf16.mxu0 0
        %565 = vmatpush1.bf16.msra.mxu0 0
        %566 = vmatprep.subr.bf16.mxu0 0
        %567 = vmatpush1.bf16.msra.mxu0 0
        %568 = vmatprep.subr.bf16.mxu0 0
        %569 = vmatpush1.bf16.msra.mxu0 0
        %570 = vmatprep.subr.bf16.mxu0 0
        %571 = vmatpush1.bf16.msra.mxu0 0
        %572 = vmatprep.subr.bf16.mxu0 0
        %573 = vmatpush1.bf16.msra.mxu0 0
        %574 = vmatprep.mubr.bf16.mxu0 0
        %575 = vmatmul.mubr.bf16.gmra.mrb[0].mxu0 %v531
        %v576 = vpop.f32.mrb[0].mxu0
        %v577 = vadd.f32 %v521, %v576
        %v578 = vpop.f32.mrb[0].mxu0
        %v579 = vpop.f32.mrb[0].mxu0
        %v580 = vadd.f32 %v521, %v579
        %v581 = vpop.f32.mrb[0].mxu0
        %582 = vmatprep.mubr.bf16.mxu0 0
        %583 = vmatmul.mubr.bf16.gmra.mrb[0].mxu0 %v534
        %v584 = vpop.f32.mrb[0].mxu0
        %v585 = vadd.f32 %v521, %v584
        %v586 = vpop.f32.mrb[0].mxu0
        %v587 = vpop.f32.mrb[0].mxu0
        %v588 = vadd.f32 %v521, %v587
        %v589 = vpop.f32.mrb[0].mxu0
        %590 = vmatprep.mubr.bf16.mxu0 0
        %591 = vmatmul.mubr.bf16.gmra.mrb[0].mxu0 %v537
        %v592 = vpop.f32.mrb[0].mxu0
        %v593 = vadd.f32 %v521, %v592
        %v594 = vpop.f32.mrb[0].mxu0
        %v595 = vpop.f32.mrb[0].mxu0
        %v596 = vadd.f32 %v521, %v595
        %v597 = vpop.f32.mrb[0].mxu0
        %598 = vmatprep.mubr.bf16.mxu0 0
        %599 = vmatmul.mubr.bf16.gmra.mrb[0].mxu0 %v540
        %v600 = vpop.f32.mrb[0].mxu0
        %v601 = vadd.f32 %v521, %v600
        %v602 = vpop.f32.mrb[0].mxu0
        %v603 = vpop.f32.mrb[0].mxu0
        %v604 = vadd.f32 %v521, %v603
        %v605 = vpop.f32.mrb[0].mxu0
        %606 = vdwg.mxu0
        %v607 = vmax.f32 %v577, 0.0
        %v608 = vmax.f32 %v580, 0.0
        %v609 = vmax.f32 %v585, 0.0
        %v610 = vmax.f32 %v588, 0.0
        %v611 = vmax.f32 %v593, 0.0
        %v612 = vmax.f32 %v596, 0.0
        %v613 = vmax.f32 %v601, 0.0
        %v614 = vmax.f32 %v604, 0.0
        %vm615 = vcmask 261120
        %v616 = vsel %vm615, %v607, -inf
        %v617 = vrot.slane %v616, 4
        %v618 = vmax.f32 %v616, %v617
        %v619 = vrot.slane %v618, 2
        %v620 = vmax.f32 %v618, %v619
        %v621 = vrot.slane %v620, 1
        %v622 = vmax.f32 %v620, %v621
        %v623 = vsel %vm615, %v608, -inf
        %v624 = vrot.slane %v623, 4
        %v625 = vmax.f32 %v623, %v624
        %v626 = vrot.slane %v625, 2
        %v627 = vmax.f32 %v625, %v626
        %v628 = vrot.slane %v627, 1
        %v629 = vmax.f32 %v627, %v628
        %v630 = vsel %vm615, %v609, -inf
        %v631 = vrot.slane %v630, 4
        %v632 = vmax.f32 %v630, %v631
        %v633 = vrot.slane %v632, 2
        %v634 = vmax.f32 %v632, %v633
        %v635 = vrot.slane %v634, 1
        %v636 = vmax.f32 %v634, %v635
        %v637 = vsel %vm615, %v610, -inf
        %v638 = vrot.slane %v637, 4
        %v639 = vmax.f32 %v637, %v638
        %v640 = vrot.slane %v639, 2
        %v641 = vmax.f32 %v639, %v640
        %v642 = vrot.slane %v641, 1
        %v643 = vmax.f32 %v641, %v642
        %v644 = vsel %vm615, %v611, -inf
        %v645 = vrot.slane %v644, 4
        %v646 = vmax.f32 %v644, %v645
        %v647 = vrot.slane %v646, 2
        %v648 = vmax.f32 %v646, %v647
        %v649 = vrot.slane %v648, 1
        %v650 = vmax.f32 %v648, %v649
        %v651 = vsel %vm615, %v612, -inf
        %v652 = vrot.slane %v651, 4
        %v653 = vmax.f32 %v651, %v652
        %v654 = vrot.slane %v653, 2
        %v655 = vmax.f32 %v653, %v654
        %v656 = vrot.slane %v655, 1
        %v657 = vmax.f32 %v655, %v656
        %v658 = vsel %vm615, %v613, -inf
        %v659 = vrot.slane %v658, 4
        %v660 = vmax.f32 %v658, %v659
        %v661 = vrot.slane %v660, 2
        %v662 = vmax.f32 %v660, %v661
        %v663 = vrot.slane %v662, 1
        %v664 = vmax.f32 %v662, %v663
        %v665 = vsel %vm615, %v614, -inf
        %v666 = vrot.slane %v665, 4
        %v667 = vmax.f32 %v665, %v666
        %v668 = vrot.slane %v667, 2
        %v669 = vmax.f32 %v667, %v668
        %v670 = vrot.slane %v669, 1
        %v671 = vmax.f32 %v669, %v670
        %p672 = scmp.eq.s32.totalorder %s29, 0
        // Predicated region
        $region53: #{tpu_custom_call.1} parent=51 // pred_check
          %p673 = pneg %p672
        $region54: #{tpu_custom_call.1} parent=51 // pred_check_branch
          %675 = sbr.rel (%p673) target = $region56
        $region55: #{tpu_custom_call.1} parent=51 // pred_region
          %676 = vst.msk [vmem:[#allocation2] sm:$0xff] %vm615, -inf
        $region56: #{tpu_custom_call.1} parent=51 // pred_fallthru
          _
        %v677 = vld [vmem:[#allocation2] sm:$0xff]
        %vm686 = vcmask 1041409
        %v687 = vsel %vm686, %v629, %v622
        %vm688 = vcmask 1042434
        %v689 = vsel %vm688, %v636, %v687
        %vm690 = vcmask 1043459
        %v691 = vsel %vm690, %v643, %v689
        %vm692 = vcmask 1044484
        %v693 = vsel %vm692, %v650, %v691
        %vm694 = vcmask 1045509
        %v695 = vsel %vm694, %v657, %v693
        %vm696 = vcmask 1046534
        %v697 = vsel %vm696, %v664, %v695
        %vm698 = vcmask 1047559
        %v699 = vsel %vm698, %v671, %v697
        %v701 = vmax.f32 %v677, %v699
        %702 = vst.msk [vmem:[#allocation2] sm:$0xff] %vm615, %v701
        // Predicated region
        $region57: #{tpu_custom_call.1} parent=51 // pred_check
          %p703 = pneg %p672
        $region58: #{tpu_custom_call.1} parent=51 // pred_check_branch
          %705 = sbr.rel (%p703) target = $region60
        $region59: #{tpu_custom_call.1} parent=51 // pred_region
          %v706 = vld [vmem:[#allocation2] sm:$0xff]
          %v707 = vld [vmem:[%s379] sm:$0xf]
          %v708 = vld [vmem:[%s6] sm:$0xf]
          %v709 = vld [vmem:[%s7] sm:$0x1]
          %v711 = vlaneseq
          %v712 = vshrl.u32 %v711, 7
          %v713 = vsub.s32 0, %v712
          %v714 = vrot.slane %v709, %v713
          %v717 = vsel %vm417, %v707, 0
          %v720 = vand.u32 %v708, %v433
          %722 = vmatprep.subr.bf16.mxu0 0
          %723 = vmatpush1.bf16.msra.mxu0 %v720
          %724 = vmatprep.subr.bf16.mxu0 0
          %725 = vmatpush1.bf16.msra.mxu0 0
          %726 = vmatprep.subr.bf16.mxu0 0
          %727 = vmatpush1.bf16.msra.mxu0 0
          %728 = vmatprep.subr.bf16.mxu0 0
          %729 = vmatpush1.bf16.msra.mxu0 0
          %730 = vmatprep.subr.bf16.mxu0 0
          %731 = vmatpush1.bf16.msra.mxu0 0
          %732 = vmatprep.subr.bf16.mxu0 0
          %733 = vmatpush1.bf16.msra.mxu0 0
          %734 = vmatprep.subr.bf16.mxu0 0
          %735 = vmatpush1.bf16.msra.mxu0 0
          %736 = vmatprep.subr.bf16.mxu0 0
          %737 = vmatpush1.bf16.msra.mxu0 0
          %738 = vmatprep.subr.bf16.mxu0 0
          %739 = vmatpush1.bf16.msra.mxu0 0
          %740 = vmatprep.subr.bf16.mxu0 0
          %741 = vmatpush1.bf16.msra.mxu0 0
          %742 = vmatprep.subr.bf16.mxu0 0
          %743 = vmatpush1.bf16.msra.mxu0 0
          %744 = vmatprep.subr.bf16.mxu0 0
          %745 = vmatpush1.bf16.msra.mxu0 0
          %746 = vmatprep.subr.bf16.mxu0 0
          %747 = vmatpush1.bf16.msra.mxu0 0
          %748 = vmatprep.subr.bf16.mxu0 0
          %749 = vmatpush1.bf16.msra.mxu0 0
          %750 = vmatprep.subr.bf16.mxu0 0
          %751 = vmatpush1.bf16.msra.mxu0 0
          %752 = vmatprep.subr.bf16.mxu0 0
          %753 = vmatpush1.bf16.msra.mxu0 0
          %754 = vmatprep.mubr.bf16.mxu0 0
          %755 = vmatmul.mubr.bf16.gmra.mrb[0].mxu0 %v717
          %v756 = vpop.f32.mrb[0].mxu0
          %v757 = vadd.f32 %v714, %v756
          %v758 = vpop.f32.mrb[0].mxu0
          %v759 = vpop.f32.mrb[0].mxu0
          %v760 = vpop.f32.mrb[0].mxu0
          %761 = vdwg.mxu0
          %v762 = vmax.f32 %v757, 0.0
          %v763 = vadd.f32 %v706, %v762
          %764 = vst.msk [vmem:[%s359] sm:$0xff] %vm615, %v763
        $region60: #{tpu_custom_call.1} parent=51 // pred_fallthru
          _
        %s765 = sand.u32 %s235, 1
        %s766 = scalar_lea.sflag [#allocation4], %s765
        %s767 = sand.u32 %s235, 1
        %s768 = smul.addr %s767, 8
        %s769 = scalar_lea.vmem [#allocation3], %s768
        // Predicated region
        $region61: #{tpu_custom_call.1} parent=51 // pred_check
          %p770 = pneg %p245
        $region62: #{tpu_custom_call.1} parent=51 // pred_check_branch
          %772 = sbr.rel (%p770) target = $region64
        $region63: #{tpu_custom_call.1} parent=51 // pred_region
          %s774 = ssub.s32 128, 128
          %775 = vsyncadd %s766, %s774
          %s776 = sadd.s32 %s28, %s27
          %s777 = smul.addr %s776, 128
          %s778 = scalar_lea.hbm %s8, %s777
          %s780 = sshll.u32 %s769, 4
          %s781 = int_to_ptr.vmem [resolvable:$true] %s780
          %783 = dma.vmem_to_hbm [thread:$0]  %s781, 128, %s778, %s766
        $region64: #{tpu_custom_call.1} parent=51 // pred_fallthru
          _
      $region52: #{tpu_custom_call.1} parent=5 // pred_fallthru
        _
      %p784 = scmp.le.s32.totalorder 2, %s17
      // Predicated region
      $region65: #{tpu_custom_call.1} parent=5 // pred_check
        %p785 = pneg %p784
      $region66: #{tpu_custom_call.1} parent=5 // pred_check_branch
        %787 = sbr.rel (%p785) target = $region68
      $region67: #{tpu_custom_call.1} parent=5 // pred_region
        %s788 = ssub.s32 %s17, 2
        // Predicated region
        $region69: #{tpu_custom_call.1} parent=67 // pred_check
          %p789 = pneg %p251
        $region70: #{tpu_custom_call.1} parent=67 // pred_check_branch
          %791 = sbr.rel (%p789) target = $region72
        $region71: #{tpu_custom_call.1} parent=67 // pred_region
          %s792 = sand.u32 %s236, 1
          %s793 = scalar_lea.sflag [#allocation4], %s792
          %s794 = sand.u32 %s236, 1
          %s795 = smul.addr %s794, 8
          %s796 = scalar_lea.vmem [#allocation3], %s795
          %797 = dma.done %s793, 128
        $region72: #{tpu_custom_call.1} parent=67 // pred_fallthru
          _
      $region68: #{tpu_custom_call.1} parent=5 // pred_fallthru
        _
    $region6: #{tpu_custom_call.1} parent=1 // loop_footer
      %s21 = sadd.s32 1, %s17
    $region7: #{tpu_custom_call.1} parent=1 // loop_footer_branch
      %16 = sbr.rel target = $region3
    $region8: #{tpu_custom_call.1} parent=1 // loop_exit
      _
    %798 = vsyncpa [#allocation4], 1
    %s799 = scalar_lea.sflag [#allocation4], 1
    %800 = vsyncpa %s799, 1

</llo_original>
